<compile_context>
chip_gen: v7x
topology: tpu7x:2x2x1
jax: 0.10.0
libtpu: 0.0.40
codegen_flags: <defaults>
</compile_context>

<pallas_src>
import jax
import jax.numpy as jnp
from jax.experimental import pallas as pl
from jax.experimental.pallas import tpu as pltpu

LANES = 128
MAX_ROW_TILE = 2048   # 2048 x 128 f32 = 1 MiB per input per pipeline buffer
NUM_SHARDS = 2        # split work across the 2 TensorCores on v7x


def _round_up(n, m):
    return ((n + m - 1) // m) * m


def _make_kernel(row_tile, valid_rows, blocks_per_shard, mask_needed):
    """Builds the kernel body with all static tiling parameters closed over."""

    def kernel(x_ref, y_ref, out_ref, acc_sc):
        c = pl.program_id(0)                 # shard ("parallel") axis
        k = pl.program_id(1)                 # reduction ("arbitrary") axis
        nk = pl.num_programs(1)

        @pl.when(k == 0)
        def _init():
            acc_sc[...] = jnp.zeros_like(acc_sc)

        # Hot path: native-dtype tile DMA'd in, cast + hinge on the VPU.
        x = x_ref[...].astype(jnp.float32)
        y = y_ref[...].astype(jnp.float32)
        hinge = jnp.maximum(y - x, 0.0)

        def fold(h):
            # (row_tile, 128) -> (row_tile//8, 8, 128) vreg stack; the sum over
            # the leading axis is pure elementwise VPU adds (no XLU in-loop).
            acc_sc[...] += h.reshape(row_tile // 8, 8, LANES).sum(axis=0)

        if mask_needed:
            blk = c * blocks_per_shard + k            # un-clamped block id
            start = blk * row_tile
            ragged = start + row_tile > valid_rows    # partial / duplicate blk

            @pl.when(ragged)
            def _masked():
                row_ids = start + jax.lax.broadcasted_iota(
                    jnp.int32, (row_tile, LANES), 0)
                fold(jnp.where(row_ids < valid_rows, hinge, 0.0))

            @pl.when(jnp.logical_not(ragged))
            def _plain():
                fold(hinge)
        else:
            fold(hinge)

        @pl.when(k == nk - 1)
        def _finalize():
            out_ref[0] = acc_sc[...]

    return kernel


def monotonicity_loss(x, y):
    """mean(relu(y - x)) over all elements (same semantics as the torch module)."""
    assert x.shape == y.shape, "x and y must have the same shape"
    n_elems = x.size
    assert n_elems > 0

    xf = jnp.ravel(x)
    yf = jnp.ravel(y)

    # Sublane multiple for the native dtype (8 for f32, 16 for bf16, ...).
    sub = max(8, 32 // jnp.dtype(x.dtype).itemsize)

    # Only pad (zeros -> relu(0-0)=0, contributes nothing) when the element
    # count is not lane-divisible or the slab would be shorter than one
    # sublane tile; for typical tensor sizes this branch is skipped and the
    # reshape below is a free metadata-only view (no extra HBM round trip).
    rows = _round_up(n_elems, LANES) // LANES
    if rows < sub:
        rows = sub
    padded_elems = rows * LANES
    pad = padded_elems - n_elems
    if pad:
        xf = jnp.pad(xf, (0, pad))
        yf = jnp.pad(yf, (0, pad))

    x2 = xf.reshape(rows, LANES)
    y2 = yf.reshape(rows, LANES)

    row_tile = min(MAX_ROW_TILE, (rows // sub) * sub)
    n_blocks = pl.cdiv(rows, row_tile)
    blocks_per_shard = pl.cdiv(n_blocks, NUM_SHARDS)
    mask_needed = (rows % row_tile != 0) or (n_blocks % NUM_SHARDS != 0)

    def in_map(c, k):
        # Clamp so duplicate trailing blocks (odd split) re-read a valid block;
        # their contribution is zeroed by the in-kernel row mask.
        return (jnp.minimum(c * blocks_per_shard + k, n_blocks - 1), 0)

    kernel = _make_kernel(row_tile, rows, blocks_per_shard, mask_needed)

    itemsize = jnp.dtype(x2.dtype).itemsize
    cost = pl.CostEstimate(
        flops=3 * n_elems,
        transcendentals=0,
        bytes_accessed=2 * padded_elems * itemsize + NUM_SHARDS * 8 * LANES * 4,
    )

    partials = pl.pallas_call(
        kernel,
        out_shape=jax.ShapeDtypeStruct((NUM_SHARDS, 8, LANES), jnp.float32),
        grid_spec=pltpu.PrefetchScalarGridSpec(
            num_scalar_prefetch=0,
            grid=(NUM_SHARDS, blocks_per_shard),
            in_specs=[
                pl.BlockSpec((row_tile, LANES), in_map),
                pl.BlockSpec((row_tile, LANES), in_map),
            ],
            out_specs=pl.BlockSpec((1, 8, LANES), lambda c, k: (c, 0, 0)),
            scratch_shapes=[pltpu.VMEM((8, LANES), jnp.float32)],
        ),
        compiler_params=pltpu.CompilerParams(
            dimension_semantics=("parallel", "arbitrary"),
        ),
        cost_estimate=cost,
    )(x2, y2)

    return (jnp.sum(partials) / jnp.float32(n_elems)).astype(jnp.float32)


if __name__ == "__main__":
    key = jax.random.PRNGKey(0)
    kx, ky = jax.random.split(key)

    # Small (B, C, H, W) activation pair consistent with the module's forward.
    x = jax.random.normal(kx, (2, 4, 16, 16), dtype=jnp.float32)
    y = jax.random.normal(ky, (2, 4, 16, 16), dtype=jnp.float32)

    loss = monotonicity_loss(x, y)
    jax.block_until_ready(loss)
    ref = jnp.mean(jnp.maximum(y - x, 0.0))
    assert jnp.allclose(loss, ref, rtol=1e-6, atol=1e-6), (loss, ref)

    # Ragged-shape check (exercises the pad + in-kernel row-mask path).
    kx2, ky2 = jax.random.split(ky)
    x_r = jax.random.normal(kx2, (3, 5, 7, 11), dtype=jnp.float32)
    y_r = jax.random.normal(ky2, (3, 5, 7, 11), dtype=jnp.float32)
    loss_r = monotonicity_loss(x_r, y_r)
    jax.block_until_ready(loss_r)
    ref_r = jnp.mean(jnp.maximum(y_r - x_r, 0.0))
    assert jnp.allclose(loss_r, ref_r, rtol=1e-6, atol=1e-6), (loss_r, ref_r)

    print("KERNEL_OK")
</pallas_src>

<mosaic_0001>
module attributes {stable_mosaic.version = 11 : i64} {
  func.func @kernel(%arg0: i32, %arg1: i32, %arg2: memref<16x128xf32, #tpu.memory_space<vmem>>, %arg3: memref<16x128xf32, #tpu.memory_space<vmem>>, %arg4: memref<1x8x128xf32, #tpu.memory_space<vmem>>, %arg5: memref<8x128xf32, #tpu.memory_space<vmem>>) attributes {dimension_semantics = [#tpu.dimension_semantics<parallel>, #tpu.dimension_semantics<arbitrary>], iteration_bounds = array<i64: 2, 1>, scalar_prefetch = 0 : i64, scratch_operands = 1 : i64, tpu.core_type = #tpu.core_type<tc>, window_params = [{transform_indices = @transform_0, window_bounds = array<i64: 16, 128>}, {transform_indices = @transform_1, window_bounds = array<i64: 16, 128>}, {transform_indices = @transform_2, window_bounds = array<i64: 1, 8, 128>}]} {
    %c0_i32 = arith.constant 0 : i32
    %0 = arith.cmpi eq, %arg1, %c0_i32 : i32
    %1 = arith.extui %0 : i1 to i32
    %c0_i32_0 = arith.constant 0 : i32
    %2 = arith.cmpi ne, %1, %c0_i32_0 : i32
    scf.if %2 {
      %cst_10 = arith.constant 0.000000e+00 : f32
      %21 = vector.broadcast %cst_10 : f32 to vector<8x128xf32>
      %c0_11 = arith.constant 0 : index
      %c0_12 = arith.constant 0 : index
      %22 = vector.load %arg5[%c0_11, %c0_12] : memref<8x128xf32, #tpu.memory_space<vmem>>, vector<8x128xf32>
      tpu.vector_store %arg5[%c0_11, %c0_12], %21 {strides = array<i32>} : memref<8x128xf32, #tpu.memory_space<vmem>>, vector<8x128xf32>,
    } else {
    }
    %c0 = arith.constant 0 : index
    %c0_1 = arith.constant 0 : index
    %3 = vector.load %arg2[%c0, %c0_1] : memref<16x128xf32, #tpu.memory_space<vmem>>, vector<16x128xf32>
    %c0_2 = arith.constant 0 : index
    %c0_3 = arith.constant 0 : index
    %4 = vector.load %arg3[%c0_2, %c0_3] : memref<16x128xf32, #tpu.memory_space<vmem>>, vector<16x128xf32>
    %5 = arith.subf %4, %3 : vector<16x128xf32>
    %cst = arith.constant 0.000000e+00 : f32
    %6 = vector.broadcast %cst : f32 to vector<16x128xf32>
    %7 = arith.maximumf %5, %6 : vector<16x128xf32>
    %c1_i32 = arith.constant 1 : i32
    %8 = arith.muli %arg0, %c1_i32 : i32
    %9 = arith.addi %8, %arg1 : i32
    %c16_i32 = arith.constant 16 : i32
    %10 = arith.muli %9, %c16_i32 : i32
    %c16_i32_4 = arith.constant 16 : i32
    %11 = arith.addi %10, %c16_i32_4 : i32
    %c16_i32_5 = arith.constant 16 : i32
    %12 = arith.cmpi sgt, %11, %c16_i32_5 : i32
    %13 = arith.extui %12 : i1 to i32
    %c0_i32_6 = arith.constant 0 : i32
    %14 = arith.cmpi ne, %13, %c0_i32_6 : i32
    scf.if %14 {
      %21 = tpu.iota {dimensions = array<i32: 0>} : vector<16x128xi32>
      %22 = vector.broadcast %10 : i32 to vector<16x128xi32>
      %23 = arith.addi %22, %21 : vector<16x128xi32>
      %c16_i32_10 = arith.constant 16 : i32
      %24 = vector.broadcast %c16_i32_10 : i32 to vector<16x128xi32>
      %25 = arith.cmpi slt, %23, %24 : vector<16x128xi32>
      %cst_11 = arith.constant 0.000000e+00 : f32
      %26 = vector.broadcast %cst_11 : f32 to vector<16x128xf32>
      %27 = arith.select %25, %7, %26 : vector<16x128xi1>, vector<16x128xf32>
      %c0_12 = arith.constant 0 : index
      %c0_13 = arith.constant 0 : index
      %28 = vector.load %arg5[%c0_12, %c0_13] : memref<8x128xf32, #tpu.memory_space<vmem>>, vector<8x128xf32>
      %29 = vector.shape_cast %27 : vector<16x128xf32> to vector<2x8x128xf32>
      %cst_14 = arith.constant dense<0.000000e+00> : vector<8x128xf32>
      %30 = vector.multi_reduction <add>, %29, %cst_14 [0] : vector<2x8x128xf32> to vector<8x128xf32>
      %31 = arith.addf %28, %30 : vector<8x128xf32>
      %c0_15 = arith.constant 0 : index
      %c0_16 = arith.constant 0 : index
      %32 = vector.load %arg5[%c0_15, %c0_16] : memref<8x128xf32, #tpu.memory_space<vmem>>, vector<8x128xf32>
      tpu.vector_store %arg5[%c0_15, %c0_16], %31 {strides = array<i32>} : memref<8x128xf32, #tpu.memory_space<vmem>>, vector<8x128xf32>,
    } else {
    }
    %true = arith.constant true
    %15 = arith.xori %12, %true : i1
    %16 = arith.extui %15 : i1 to i32
    %c0_i32_7 = arith.constant 0 : i32
    %17 = arith.cmpi ne, %16, %c0_i32_7 : i32
    scf.if %17 {
      %c0_10 = arith.constant 0 : index
      %c0_11 = arith.constant 0 : index
      %21 = vector.load %arg5[%c0_10, %c0_11] : memref<8x128xf32, #tpu.memory_space<vmem>>, vector<8x128xf32>
      %22 = vector.shape_cast %7 : vector<16x128xf32> to vector<2x8x128xf32>
      %cst_12 = arith.constant dense<0.000000e+00> : vector<8x128xf32>
      %23 = vector.multi_reduction <add>, %22, %cst_12 [0] : vector<2x8x128xf32> to vector<8x128xf32>
      %24 = arith.addf %21, %23 : vector<8x128xf32>
      %c0_13 = arith.constant 0 : index
      %c0_14 = arith.constant 0 : index
      %25 = vector.load %arg5[%c0_13, %c0_14] : memref<8x128xf32, #tpu.memory_space<vmem>>, vector<8x128xf32>
      tpu.vector_store %arg5[%c0_13, %c0_14], %24 {strides = array<i32>} : memref<8x128xf32, #tpu.memory_space<vmem>>, vector<8x128xf32>,
    } else {
    }
    %c0_i32_8 = arith.constant 0 : i32
    %18 = arith.cmpi eq, %arg1, %c0_i32_8 : i32
    %19 = arith.extui %18 : i1 to i32
    %c0_i32_9 = arith.constant 0 : i32
    %20 = arith.cmpi ne, %19, %c0_i32_9 : i32
    scf.if %20 {
      %c0_10 = arith.constant 0 : index
      %c0_11 = arith.constant 0 : index
      %21 = vector.load %arg5[%c0_10, %c0_11] : memref<8x128xf32, #tpu.memory_space<vmem>>, vector<8x128xf32>
      %c0_12 = arith.constant 0 : index
      %c0_13 = arith.constant 0 : index
      %c0_14 = arith.constant 0 : index
      %22 = vector.load %arg4[%c0_12, %c0_13, %c0_14] : memref<1x8x128xf32, #tpu.memory_space<vmem>>, vector<1x8x128xf32>
      %23 = vector.shape_cast %22 : vector<1x8x128xf32> to vector<8x128xf32>
      %24 = vector.shape_cast %21 : vector<8x128xf32> to vector<1x8x128xf32>
      tpu.vector_store %arg4[%c0_12, %c0_13, %c0_14], %24 {strides = array<i32>} : memref<1x8x128xf32, #tpu.memory_space<vmem>>, vector<1x8x128xf32>,
    } else {
    }
    return
  }
  func.func @transform_0(%arg0: i32, %arg1: i32) -> (i32, i32) {
    %c1_i32 = arith.constant 1 : i32
    %0 = arith.muli %arg0, %c1_i32 : i32
    %1 = arith.addi %0, %arg1 : i32
    %c0_i32 = arith.constant 0 : i32
    %2 = arith.minsi %1, %c0_i32 : i32
    %c0_i32_0 = arith.constant 0 : i32
    %c0_i32_1 = arith.constant 0 : i32
    return %2, %c0_i32_0 : i32, i32
  }
  func.func @transform_1(%arg0: i32, %arg1: i32) -> (i32, i32) {
    %c1_i32 = arith.constant 1 : i32
    %0 = arith.muli %arg0, %c1_i32 : i32
    %1 = arith.addi %0, %arg1 : i32
    %c0_i32 = arith.constant 0 : i32
    %2 = arith.minsi %1, %c0_i32 : i32
    %c0_i32_0 = arith.constant 0 : i32
    %c0_i32_1 = arith.constant 0 : i32
    return %2, %c0_i32_0 : i32, i32
  }
  func.func @transform_2(%arg0: i32, %arg1: i32) -> (i32, i32, i32) {
    %c0_i32 = arith.constant 0 : i32
    %c0_i32_0 = arith.constant 0 : i32
    %c0_i32_1 = arith.constant 0 : i32
    return %arg0, %c0_i32, %c0_i32_0 : i32, i32, i32
  }
}

</mosaic_0001>

<llo_original>
// kernel: tpu_custom_call.1
$region0: #{tpu_custom_call.1}
  #allocation0 [shape = 'u32[]', space=smem, size = 0x4, offset = 0x4, fixed_abs, tag = 'smem constant byte address 0x4 - core index']
  #allocation1 [shape = 'u32[144,128]{1,0:T(1,128)}', space=vmem, size = 0x12000, scoped, tag = 'internal scratch']
  #allocation2 [shape = 'f32[8,128]{1,0:T(8,128)}', space=vmem, size = 0x1000, scoped, tag = 'scratch operand']
  %s0 = inlined_call_operand.hbm [shape: f32[16,128], index: 0, kind: input, shape index: {}]
  %s1 = inlined_call_operand.hbm [shape: f32[16,128], index: 1, kind: input, shape index: {}]
  %s2 = inlined_call_operand.hbm [shape: f32[2,8,128], index: 2, kind: output, shape index: {}]
  %s3 = sld [smem:[#allocation0]]
  $region65: #{tpu_custom_call.1} parent=0
    _
  %s5 = ssub.s32 1, %s3
  %s6 = scalar_select 0, %s5, %s3
  $region1: #{tpu_custom_call.1} parent=0
    #allocation3 [shape = 'u8[16384]{0}', space=vmem, size = 0x4000, scoped, tag = 'input window, operand 0']
    #allocation4 [shape = 's32[2]{0}', space=sflag, size = 0x8, scoped, tag = 'scoped memory for tpu_custom_call.1']
    #allocation5 [shape = 's32[2]{0}', space=sflag, size = 0x8, scoped, tag = 'scoped memory for tpu_custom_call.1']
    #allocation6 [shape = 'u8[16384]{0}', space=vmem, size = 0x4000, scoped, tag = 'input window, operand 1']
    #allocation7 [shape = 's32[2]{0}', space=sflag, size = 0x8, scoped, tag = 'scoped memory for tpu_custom_call.1']
    #allocation8 [shape = 'u8[8192]{0}', space=vmem, size = 0x2000, scoped, tag = 'output window, operand 0']
    %7 = vsyncpa [#allocation4], 0
    %s8 = scalar_lea.sflag [#allocation4], 1
    %9 = vsyncpa %s8, 0
    %10 = vsyncpa [#allocation7], 0
    %s11 = scalar_lea.sflag [#allocation7], 1
    %12 = vsyncpa %s11, 0
    %13 = vsyncpa [#allocation5], 0
    %s14 = scalar_lea.sflag [#allocation5], 1
    %15 = vsyncpa %s14, 0
    loop: start=0, step=1, limit=4
    $region2: #{tpu_custom_call.1} parent=1 // loop_pre_header
      _
    $region3: #{tpu_custom_call.1} parent=1 // loop_header
      %s17 = sphi 0, %s21
      %p18 = scmp.ge.s32.totalorder %s17, 4
      %s24 = sphi 0, %s36
      %s25 = sphi 0, %s32
      %s26 = sphi 0, %s24
      %s27 = sphi 0, %s25
      %s28 = sphi 0, %s26
      %s29 = sphi 0, %s27
      %s45 = sphi 0, %s47
      %s48 = sphi 0, %s45
      %s49 = sphi 0, %s48
      %s65 = sphi 0, %s49
      %s77 = sphi 0, %s79
      %s80 = sphi 0, %s77
      %s81 = sphi 0, %s80
      %s97 = sphi 0, %s81
      %s103 = sphi 0, %s105
      %s106 = sphi 0, %s103
      %s107 = sphi 0, %s106
      %s123 = sphi 0, %s107
    $region4: #{tpu_custom_call.1} parent=1 // loop_header_branch
      %20 = sbr.rel (%p18) target = $region8
    $region5: #{tpu_custom_call.1} parent=1 // loop_body
      %s22 = ssub.s32 %s17, 1
      %s23 = ssub.s32 %s17, 2
      %s30 = sadd.s32 1, %s25
      %p31 = scmp.ge.s32.totalorder %s30, 1
      %s32 = scalar_select %p31, 0, %s30
      %s33 = sadd.s32 1, %s24
      %s34 = scalar_select %p31, %s33, %s24
      %p35 = scmp.ge.s32.totalorder %s34, 2
      %s36 = scalar_select %p35, 0, %s34
      %s37 = sadd.s32 %s24, %s25
      %p38 = scmp.lt.s32.totalorder %s37, 0
      %s39 = scalar_select %p38, %s37, 0
      %s40 = sadd.s32 %s36, %s32
      %p41 = scmp.lt.s32.totalorder %s40, 0
      %s42 = scalar_select %p41, %s40, 0
      %s43 = ssub.s32 %s39, %s42
      %p44 = scmp.eq.s32.totalorder %s43, 0
      %s46 = sadd.s32 %s45, 1
      %s47 = scalar_select %p44, %s45, %s46
      %p50 = pneg %p44
      %p51 = scmp.eq.s32.totalorder %s17, 1
      %p52 = por %p50, %p51
      %p53 = scmp.ne.s32.totalorder %s45, %s48
      %p54 = scmp.eq.s32.totalorder %s17, 0
      %p55 = por %p53, %p54
      %p56 = scmp.ne.s32.totalorder %s45, %s48
      %p57 = scmp.eq.s32.totalorder %s22, 1
      %p58 = por %p56, %p57
      %p59 = scmp.ne.s32.totalorder %s48, %s49
      %p60 = scmp.eq.s32.totalorder %s22, 0
      %p61 = por %p59, %p60
      %p62 = scmp.ne.s32.totalorder %s48, %s49
      %p63 = scmp.eq.s32.totalorder %s23, 1
      %p64 = por %p62, %p63
      %p66 = scmp.ne.s32.totalorder %s49, %s65
      %p67 = scmp.eq.s32.totalorder %s23, 0
      %p68 = por %p66, %p67
      %s69 = sadd.s32 %s24, %s25
      %p70 = scmp.lt.s32.totalorder %s69, 0
      %s71 = scalar_select %p70, %s69, 0
      %s72 = sadd.s32 %s36, %s32
      %p73 = scmp.lt.s32.totalorder %s72, 0
      %s74 = scalar_select %p73, %s72, 0
      %s75 = ssub.s32 %s71, %s74
      %p76 = scmp.eq.s32.totalorder %s75, 0
      %s78 = sadd.s32 %s77, 1
      %s79 = scalar_select %p76, %s77, %s78
      %p82 = pneg %p76
      %p83 = scmp.eq.s32.totalorder %s17, 1
      %p84 = por %p82, %p83
      %p85 = scmp.ne.s32.totalorder %s77, %s80
      %p86 = scmp.eq.s32.totalorder %s17, 0
      %p87 = por %p85, %p86
      %p88 = scmp.ne.s32.totalorder %s77, %s80
      %p89 = scmp.eq.s32.totalorder %s22, 1
      %p90 = por %p88, %p89
      %p91 = scmp.ne.s32.totalorder %s80, %s81
      %p92 = scmp.eq.s32.totalorder %s22, 0
      %p93 = por %p91, %p92
      %p94 = scmp.ne.s32.totalorder %s80, %s81
      %p95 = scmp.eq.s32.totalorder %s23, 1
      %p96 = por %p94, %p95
      %p98 = scmp.ne.s32.totalorder %s81, %s97
      %p99 = scmp.eq.s32.totalorder %s23, 0
      %p100 = por %p98, %p99
      %s101 = ssub.s32 %s24, %s36
      %p102 = scmp.eq.s32.totalorder %s101, 0
      %s104 = sadd.s32 %s103, 1
      %s105 = scalar_select %p102, %s103, %s104
      %p108 = pneg %p102
      %p109 = scmp.eq.s32.totalorder %s17, 1
      %p110 = por %p108, %p109
      %p111 = scmp.ne.s32.totalorder %s103, %s106
      %p112 = scmp.eq.s32.totalorder %s17, 0
      %p113 = por %p111, %p112
      %p114 = scmp.ne.s32.totalorder %s103, %s106
      %p115 = scmp.eq.s32.totalorder %s22, 1
      %p116 = por %p114, %p115
      %p117 = scmp.ne.s32.totalorder %s106, %s107
      %p118 = scmp.eq.s32.totalorder %s22, 0
      %p119 = por %p117, %p118
      %p120 = scmp.ne.s32.totalorder %s106, %s107
      %p121 = scmp.eq.s32.totalorder %s23, 1
      %p122 = por %p120, %p121
      %p124 = scmp.ne.s32.totalorder %s107, %s123
      %p125 = scmp.eq.s32.totalorder %s23, 0
      %p126 = por %p124, %p125
      %p127 = scmp.le.s32.totalorder 1, %s17
      %p128 = scmp.lt.s32.totalorder %s17, 3
      %p129 = pnand %p127, %p128
      %p130 = pneg %p129
      // Predicated region
      $region9: #{tpu_custom_call.1} parent=5 // pred_check
        _
      $region10: #{tpu_custom_call.1} parent=5 // pred_check_branch
        %132 = sbr.rel (%p129) target = $region12
      $region11: #{tpu_custom_call.1} parent=5 // pred_region
        %s133 = ssub.s32 %s17, 1
      $region12: #{tpu_custom_call.1} parent=5 // pred_fallthru
        _
      %p134 = scmp.lt.s32.totalorder %s17, 2
      // Predicated region
      $region13: #{tpu_custom_call.1} parent=5 // pred_check
        %p135 = pneg %p134
      $region14: #{tpu_custom_call.1} parent=5 // pred_check_branch
        %137 = sbr.rel (%p135) target = $region16
      $region15: #{tpu_custom_call.1} parent=5 // pred_region
        // Predicated region
        $region17: #{tpu_custom_call.1} parent=15 // pred_check
          %p138 = pneg %p55
        $region18: #{tpu_custom_call.1} parent=15 // pred_check_branch
          %140 = sbr.rel (%p138) target = $region20
        $region19: #{tpu_custom_call.1} parent=15 // pred_region
          %s141 = sand.u32 %s45, 1
          %s142 = scalar_lea.sflag [#allocation4], %s141
          %s143 = sand.u32 %s45, 1
          %s144 = smul.addr %s143, 16
          %s145 = scalar_lea.vmem [#allocation3], %s144
          %s146 = sadd.s32 %s24, %s25
          %p147 = scmp.lt.s32.totalorder %s146, 0
          %s148 = scalar_select %p147, %s146, 0
          %s149 = smul.u32 2, %s148
          %s151 = ssub.s32 256, 256
          %152 = vsyncadd %s142, %s151
          %s153 = smul.addr %s149, 128
          %s154 = scalar_lea.hbm %s0, %s153
          %s155 = sshll.u32 %s145, 4
          %s156 = int_to_ptr.vmem [resolvable:$true] %s155
          %161 = dma.hbm_to_vmem [thread:$0]  %s154, 256, %s156, %s142, 128, 128, 8
        $region20: #{tpu_custom_call.1} parent=15 // pred_fallthru
          _
        // Predicated region
        $region21: #{tpu_custom_call.1} parent=15 // pred_check
          %p162 = pneg %p87
        $region22: #{tpu_custom_call.1} parent=15 // pred_check_branch
          %164 = sbr.rel (%p162) target = $region24
        $region23: #{tpu_custom_call.1} parent=15 // pred_region
          %s165 = sand.u32 %s77, 1
          %s166 = scalar_lea.sflag [#allocation7], %s165
          %s167 = sand.u32 %s77, 1
          %s168 = smul.addr %s167, 16
          %s169 = scalar_lea.vmem [#allocation6], %s168
          %s170 = sadd.s32 %s24, %s25
          %p171 = scmp.lt.s32.totalorder %s170, 0
          %s172 = scalar_select %p171, %s170, 0
          %s173 = smul.u32 2, %s172
          %s175 = ssub.s32 256, 256
          %176 = vsyncadd %s166, %s175
          %s177 = smul.addr %s173, 128
          %s178 = scalar_lea.hbm %s1, %s177
          %s179 = sshll.u32 %s169, 4
          %s180 = int_to_ptr.vmem [resolvable:$true] %s179
          %185 = dma.hbm_to_vmem [thread:$0]  %s178, 256, %s180, %s166, 128, 128, 8
        $region24: #{tpu_custom_call.1} parent=15 // pred_fallthru
          _
      $region16: #{tpu_custom_call.1} parent=5 // pred_fallthru
        _
      %p186 = scmp.le.s32.totalorder 1, %s17
      %p187 = scmp.lt.s32.totalorder %s17, 3
      %p188 = pnand %p186, %p187
      %p189 = pneg %p188
      // Predicated region
      $region25: #{tpu_custom_call.1} parent=5 // pred_check
        _
      $region26: #{tpu_custom_call.1} parent=5 // pred_check_branch
        %191 = sbr.rel (%p188) target = $region28
      $region27: #{tpu_custom_call.1} parent=5 // pred_region
        %s192 = ssub.s32 %s17, 1
        %s193 = sand.u32 %s48, 1
        %s194 = scalar_lea.sflag [#allocation4], %s193
        %s195 = sand.u32 %s48, 1
        %s196 = smul.addr %s195, 16
        %s197 = scalar_lea.vmem [#allocation3], %s196
        // Predicated region
        $region29: #{tpu_custom_call.1} parent=27 // pred_check
          %p198 = pneg %p61
        $region30: #{tpu_custom_call.1} parent=27 // pred_check_branch
          %200 = sbr.rel (%p198) target = $region32
        $region31: #{tpu_custom_call.1} parent=27 // pred_region
          %201 = dma.done %s194, 256
        $region32: #{tpu_custom_call.1} parent=27 // pred_fallthru
          _
        %s202 = sand.u32 %s80, 1
        %s203 = scalar_lea.sflag [#allocation7], %s202
        %s204 = sand.u32 %s80, 1
        %s205 = smul.addr %s204, 16
        %s206 = scalar_lea.vmem [#allocation6], %s205
        // Predicated region
        $region33: #{tpu_custom_call.1} parent=27 // pred_check
          %p207 = pneg %p93
        $region34: #{tpu_custom_call.1} parent=27 // pred_check_branch
          %209 = sbr.rel (%p207) target = $region36
        $region35: #{tpu_custom_call.1} parent=27 // pred_region
          %210 = dma.done %s203, 256
        $region36: #{tpu_custom_call.1} parent=27 // pred_fallthru
          _
        %s211 = sand.u32 %s48, 1
        %s212 = scalar_lea.sflag [#allocation4], %s211
        %s213 = sand.u32 %s48, 1
        %s214 = smul.addr %s213, 16
        %s215 = scalar_lea.vmem [#allocation3], %s214
        %p216 = pneg %p61
        %p217 = pneg %p58
        %s218 = sand.u32 %s80, 1
        %s219 = scalar_lea.sflag [#allocation7], %s218
        %s220 = sand.u32 %s80, 1
        %s221 = smul.addr %s220, 16
        %s222 = scalar_lea.vmem [#allocation6], %s221
        %p223 = pneg %p93
        %p224 = pneg %p90
        %p225 = pneg %p119
        %p226 = pneg %p116
        %s227 = sand.u32 %s106, 1
        %s228 = scalar_lea.sflag [#allocation5], %s227
        %s229 = sand.u32 %s106, 1
        %s230 = smul.addr %s229, 8
        %s231 = scalar_lea.vmem [#allocation8], %s230
        %s232 = sadd.s32 %s26, %s27
        %p233 = scmp.lt.s32.totalorder %s232, 0
        %s234 = scalar_select %p233, %s232, 0
        %s235 = smul.u32 2, %s234
        %s236 = sadd.s32 %s26, %s27
        %p237 = scmp.lt.s32.totalorder %s236, 0
        %s238 = scalar_select %p237, %s236, 0
        %s239 = smul.u32 2, %s238
        %p240 = scmp.eq.s32.totalorder %s27, 0
        // Predicated region
        $region37: #{tpu_custom_call.1} parent=27 // pred_check
          %p241 = pneg %p240
        $region38: #{tpu_custom_call.1} parent=27 // pred_check_branch
          %243 = sbr.rel (%p241) target = $region40
        $region39: #{tpu_custom_call.1} parent=27 // pred_region
          %244 = vst [vmem:[#allocation2] sm:$0xff] 0.0
        $region40: #{tpu_custom_call.1} parent=27 // pred_fallthru
          _
        %v245 = vld [vmem:[%s197] sm:$0xff]
        %v246 = vld [vmem:[%s197 + $0x8] sm:$0xff]
        %v247 = vld [vmem:[%s206] sm:$0xff]
        %v248 = vld [vmem:[%s206 + $0x8] sm:$0xff]
        %v249 = vsub.f32 %v247, %v245
        %v250 = vsub.f32 %v248, %v246
        %v251 = vmax.f32 %v249, 0.0
        %v252 = vmax.f32 %v250, 0.0
        %s253 = sadd.s32 %s26, %s27
        %s254 = smul.u32 %s253, 16
        %s255 = sadd.s32 %s254, 16
        %p256 = scmp.gt.s32.totalorder %s255, 16
        // Predicated region
        $region41: #{tpu_custom_call.1} parent=27 // pred_check
          %p257 = pneg %p256
        $region42: #{tpu_custom_call.1} parent=27 // pred_check_branch
          %259 = sbr.rel (%p257) target = $region44
        $region43: #{tpu_custom_call.1} parent=27 // pred_region
          %v260 = vlaneseq
          %v261 = vshrl.u32 %v260, 7
          %v262 = vadd.s32 %v261, 8
          %v263 = vstv %s254
          %v264 = vadd.s32 %v263, %v261
          %v265 = vadd.s32 %v263, %v262
          %vm266 = vcmp.lt.s32.totalorder %v264, 16
          %vm267 = vcmp.lt.s32.totalorder %v265, 16
          %v268 = vsel %vm266, %v251, 0.0
          %v269 = vsel %vm267, %v252, 0.0
          %v270 = vld [vmem:[#allocation2] sm:$0xff]
          %v271 = vadd.f32 %v268, %v269
          %v272 = vadd.f32 %v270, %v271
          %273 = vst [vmem:[#allocation2] sm:$0xff] %v272
        $region44: #{tpu_custom_call.1} parent=27 // pred_fallthru
          _
        %p274 = scmp.le.s32.totalorder %s255, 16
        // Predicated region
        $region45: #{tpu_custom_call.1} parent=27 // pred_check
          %p275 = pneg %p274
        $region46: #{tpu_custom_call.1} parent=27 // pred_check_branch
          %277 = sbr.rel (%p275) target = $region48
        $region47: #{tpu_custom_call.1} parent=27 // pred_region
          %v278 = vld [vmem:[#allocation2] sm:$0xff]
          %v279 = vadd.f32 %v251, %v252
          %v280 = vadd.f32 %v278, %v279
          %281 = vst [vmem:[#allocation2] sm:$0xff] %v280
        $region48: #{tpu_custom_call.1} parent=27 // pred_fallthru
          _
        // Predicated region
        $region49: #{tpu_custom_call.1} parent=27 // pred_check
          %p282 = pneg %p240
        $region50: #{tpu_custom_call.1} parent=27 // pred_check_branch
          %284 = sbr.rel (%p282) target = $region52
        $region51: #{tpu_custom_call.1} parent=27 // pred_region
          %v285 = vld [vmem:[#allocation2] sm:$0xff]
          %286 = vst [vmem:[%s231] sm:$0xff] %v285
        $region52: #{tpu_custom_call.1} parent=27 // pred_fallthru
          _
        %s287 = sand.u32 %s106, 1
        %s288 = scalar_lea.sflag [#allocation5], %s287
        %s289 = sand.u32 %s106, 1
        %s290 = smul.addr %s289, 8
        %s291 = scalar_lea.vmem [#allocation8], %s290
        // Predicated region
        $region53: #{tpu_custom_call.1} parent=27 // pred_check
          %p292 = pneg %p116
        $region54: #{tpu_custom_call.1} parent=27 // pred_check_branch
          %294 = sbr.rel (%p292) target = $region56
        $region55: #{tpu_custom_call.1} parent=27 // pred_region
          %s296 = ssub.s32 128, 128
          %297 = vsyncadd %s288, %s296
          %s298 = smul.addr %s26, 128
          %s299 = scalar_lea.hbm %s2, %s298
          %s301 = sshll.u32 %s291, 4
          %s302 = int_to_ptr.vmem [resolvable:$true] %s301
          %304 = dma.vmem_to_hbm [thread:$0]  %s302, 128, %s299, %s288
        $region56: #{tpu_custom_call.1} parent=27 // pred_fallthru
          _
      $region28: #{tpu_custom_call.1} parent=5 // pred_fallthru
        _
      %p305 = scmp.le.s32.totalorder 2, %s17
      // Predicated region
      $region57: #{tpu_custom_call.1} parent=5 // pred_check
        %p306 = pneg %p305
      $region58: #{tpu_custom_call.1} parent=5 // pred_check_branch
        %308 = sbr.rel (%p306) target = $region60
      $region59: #{tpu_custom_call.1} parent=5 // pred_region
        %s309 = ssub.s32 %s17, 2
        // Predicated region
        $region61: #{tpu_custom_call.1} parent=59 // pred_check
          %p310 = pneg %p122
        $region62: #{tpu_custom_call.1} parent=59 // pred_check_branch
          %312 = sbr.rel (%p310) target = $region64
        $region63: #{tpu_custom_call.1} parent=59 // pred_region
          %s313 = sand.u32 %s107, 1
          %s314 = scalar_lea.sflag [#allocation5], %s313
          %s315 = sand.u32 %s107, 1
          %s316 = smul.addr %s315, 8
          %s317 = scalar_lea.vmem [#allocation8], %s316
          %318 = dma.done %s314, 128
        $region64: #{tpu_custom_call.1} parent=59 // pred_fallthru
          _
      $region60: #{tpu_custom_call.1} parent=5 // pred_fallthru
        _
    $region6: #{tpu_custom_call.1} parent=1 // loop_footer
      %s21 = sadd.s32 1, %s17
    $region7: #{tpu_custom_call.1} parent=1 // loop_footer_branch
      %16 = sbr.rel target = $region3
    $region8: #{tpu_custom_call.1} parent=1 // loop_exit
      _
    %319 = vsyncpa [#allocation4], 1
    %s320 = scalar_lea.sflag [#allocation4], 1
    %321 = vsyncpa %s320, 1
    %322 = vsyncpa [#allocation7], 1
    %s323 = scalar_lea.sflag [#allocation7], 1
    %324 = vsyncpa %s323, 1
    %325 = vsyncpa [#allocation5], 1
    %s326 = scalar_lea.sflag [#allocation5], 1
    %327 = vsyncpa %s326, 1

</llo_original>
